<compile_context>
chip_gen: v7x
topology: tpu7x:2x2x1
jax: 0.10.0
libtpu: 0.0.40
codegen_flags: <defaults>
</compile_context>

<pallas_src>
import jax
import jax.numpy as jnp
from jax import lax
from jax.experimental import pallas as pl
from jax.experimental.pallas import tpu as pltpu


def lstm_fc_kernel(x_ref, wih_ref, bias_ref, whh_ref, fcw_ref, fcb_ref, o_ref):
    """Whole forward pass (LSTM recurrence + Linear on last hidden state).

    x_ref    : [B, T, I]  f32   batch_first input (as given to the module)
    wih_ref  : [I, 4H]    f32   input->gate weights, columns ordered i|f|g|o
    bias_ref : [1, 4H]    f32   b_ih + b_hh
    whh_ref  : [H, 4H]    f32   recurrent weights (w_hh.T), columns i|f|g|o
    fcw_ref  : [1, H]     f32   fc.weight
    fcb_ref  : [1, 1]     f32   fc.bias
    o_ref    : [B, 1]     f32
    """
    B, T, I = x_ref.shape
    H4 = whh_ref.shape[1]
    H = H4 // 4

    xv = x_ref[...]        # [B, T, I]
    wih = wih_ref[...]     # [I, 4H]
    bias = bias_ref[...]   # [1, 4H]
    whh = whh_ref[...]     # [H, 4H]

    # Lane mask: tanh on the g-gate lanes [2H, 3H), sigmoid everywhere else.
    lane = lax.broadcasted_iota(jnp.int32, (B, H4), 1)
    g_lane = (lane >= 2 * H) & (lane < 3 * H)

    c = jnp.zeros((B, H), jnp.float32)
    h = jnp.zeros((B, H), jnp.float32)

    # T is small and static: fully unroll so every slice is static and the
    # scheduler can overlap step t+1's VPU/EUP work with step t's MXU drain.
    for t in range(T):
        x_t = xv[:, t, :]                                   # [B, I]
        if I == 1:
            gx_t = x_t * wih + bias                         # VPU broadcast mul
        else:
            gx_t = jnp.dot(x_t, wih,
                           preferred_element_type=jnp.float32) + bias

        if t == 0:
            # h0 == 0 (nn.LSTM default): skip the recurrent matmul entirely.
            gates = gx_t                                    # [B, 4H]
        else:
            gates = gx_t + jnp.dot(h, whh,
                                   preferred_element_type=jnp.float32)

        # Single fused activation over the full [B, 4H] slab.
        act = jnp.where(g_lane, jnp.tanh(gates), jax.nn.sigmoid(gates))
        i_g = act[:, 0 * H:1 * H]
        f_g = act[:, 1 * H:2 * H]
        g_g = act[:, 2 * H:3 * H]
        o_g = act[:, 3 * H:4 * H]

        if t == 0:
            c = i_g * g_g                                   # f*c drops (c0 == 0)
        else:
            c = f_g * c + i_g * g_g
        h = o_g * jnp.tanh(c)

    # FC head: elementwise multiply + lane reduction (no MXU round trip).
    out = jnp.sum(h * fcw_ref[...], axis=1, keepdims=True) + fcb_ref[...]
    o_ref[...] = out


def prepare_params(w_ih, w_hh, b_ih, b_hh, fc_w, fc_b):
    """One-time weight re-layout (call once, outside the hot jitted path)."""
    H4 = w_ih.shape[0]
    wih_t = w_ih.T.astype(jnp.float32)                       # [I, 4H], cols i|f|g|o
    bias = (b_ih + b_hh).astype(jnp.float32).reshape(1, H4)  # [1, 4H]
    whh_all = w_hh.T.astype(jnp.float32)                     # [H, 4H], cols i|f|g|o
    fcw = fc_w.astype(jnp.float32)                           # [1, H]
    fcb = fc_b.astype(jnp.float32).reshape(1, 1)             # [1, 1]
    return wih_t, bias, whh_all, fcw, fcb


@jax.jit
def model_forward(x_btI, wih_t, bias, whh_all, fcw, fcb):
    """x_btI: [B, T, I] (batch_first, like the PyTorch module). Returns [B, 1]."""
    B = x_btI.shape[0]
    vmem = pl.BlockSpec(memory_space=pltpu.MemorySpace.VMEM)
    # Single invocation, no grid: all operands are a few KiB and fit VMEM.
    # TODO(synk): if batch ever grows, add a grid over B with
    # dimension_semantics=("parallel",) so v7x's second TensorCore is used.
    return pl.pallas_call(
        lstm_fc_kernel,
        out_shape=jax.ShapeDtypeStruct((B, 1), jnp.float32),
        in_specs=[vmem] * 6,
        out_specs=vmem,
    )(x_btI, wih_t, bias, whh_all, fcw, fcb)


def reference_forward(x_btI, w_ih, w_hh, b_ih, b_hh, fc_w, fc_b):
    """Pure-JAX reference matching torch.nn.LSTM (batch_first) + Linear."""
    B, T, I = x_btI.shape
    H = w_hh.shape[1]
    h = jnp.zeros((B, H), jnp.float32)
    c = jnp.zeros((B, H), jnp.float32)
    for t in range(T):
        x_t = x_btI[:, t, :]
        gates = x_t @ w_ih.T + h @ w_hh.T + b_ih + b_hh
        i_g = jax.nn.sigmoid(gates[:, 0 * H:1 * H])
        f_g = jax.nn.sigmoid(gates[:, 1 * H:2 * H])
        g_g = jnp.tanh(gates[:, 2 * H:3 * H])
        o_g = jax.nn.sigmoid(gates[:, 3 * H:4 * H])
        c = f_g * c + i_g * g_g
        h = o_g * jnp.tanh(c)
    return h @ fc_w.T + fc_b


if __name__ == "__main__":
    # Small shapes consistent with the module: stock series -> x[..., None]
    B, T = 2, 8
    input_size, hidden_size = 1, 32

    key = jax.random.PRNGKey(0)
    k_x, k1, k2, k3, k4, k5, k6 = jax.random.split(key, 7)

    # Deterministic "PyTorch-like" init: uniform(-1/sqrt(H), 1/sqrt(H)).
    bound = 1.0 / jnp.sqrt(jnp.float32(hidden_size))
    u = lambda k, shape: jax.random.uniform(
        k, shape, jnp.float32, minval=-bound, maxval=bound)

    x = jax.random.normal(k_x, (B, T, input_size), jnp.float32)  # [B, T, 1]
    w_ih = u(k1, (4 * hidden_size, input_size))
    w_hh = u(k2, (4 * hidden_size, hidden_size))
    b_ih = u(k3, (4 * hidden_size,))
    b_hh = u(k4, (4 * hidden_size,))
    fc_w = u(k5, (1, hidden_size))
    fc_b = u(k6, (1,))

    params = prepare_params(w_ih, w_hh, b_ih, b_hh, fc_w, fc_b)
    out = model_forward(x, *params)
    out = jax.block_until_ready(out)

    ref = reference_forward(x, w_ih, w_hh, b_ih, b_hh, fc_w, fc_b)
    assert out.shape == (B, 1)
    assert jnp.allclose(out, ref, atol=1e-5, rtol=1e-5), (out, ref)

    print("KERNEL_OK")
</pallas_src>

<mosaic_0001>
module attributes {stable_mosaic.version = 11 : i64} {
  func.func @lstm_fc_kernel(%arg0: memref<2x8x1xf32, #tpu.memory_space<vmem>>, %arg1: memref<1x128xf32, #tpu.memory_space<vmem>>, %arg2: memref<1x128xf32, #tpu.memory_space<vmem>>, %arg3: memref<32x128xf32, #tpu.memory_space<vmem>>, %arg4: memref<1x32xf32, #tpu.memory_space<vmem>>, %arg5: memref<1x1xf32, #tpu.memory_space<vmem>>, %arg6: memref<2x1xf32, #tpu.memory_space<vmem>>) attributes {dimension_semantics = [], scalar_prefetch = 0 : i64, scratch_operands = 0 : i64, tpu.core_type = #tpu.core_type<tc>} {
    %c0 = arith.constant 0 : index
    %c0_0 = arith.constant 0 : index
    %c0_1 = arith.constant 0 : index
    %0 = vector.load %arg0[%c0, %c0_0, %c0_1] : memref<2x8x1xf32, #tpu.memory_space<vmem>>, vector<2x8x1xf32>
    %c0_2 = arith.constant 0 : index
    %c0_3 = arith.constant 0 : index
    %1 = vector.load %arg1[%c0_2, %c0_3] : memref<1x128xf32, #tpu.memory_space<vmem>>, vector<1x128xf32>
    %c0_4 = arith.constant 0 : index
    %c0_5 = arith.constant 0 : index
    %2 = vector.load %arg2[%c0_4, %c0_5] : memref<1x128xf32, #tpu.memory_space<vmem>>, vector<1x128xf32>
    %c0_6 = arith.constant 0 : index
    %c0_7 = arith.constant 0 : index
    %3 = vector.load %arg3[%c0_6, %c0_7] : memref<32x128xf32, #tpu.memory_space<vmem>>, vector<32x128xf32>
    %4 = tpu.iota {dimensions = array<i32: 1>} : vector<2x128xi32>
    %c64_i32 = arith.constant 64 : i32
    %5 = vector.broadcast %c64_i32 : i32 to vector<2x128xi32>
    %6 = arith.cmpi sge, %4, %5 : vector<2x128xi32>
    %c96_i32 = arith.constant 96 : i32
    %7 = vector.broadcast %c96_i32 : i32 to vector<2x128xi32>
    %8 = arith.cmpi slt, %4, %7 : vector<2x128xi32>
    %9 = arith.andi %6, %8 : vector<2x128xi1>
    %10 = vector.extract_strided_slice %0 {offsets = [0, 0, 0], sizes = [2, 1, 1], strides = [1, 1, 1]} : vector<2x8x1xf32> to vector<2x1x1xf32>
    %11 = vector.shape_cast %10 : vector<2x1x1xf32> to vector<2x1xf32>
    %12 = vector.broadcast %11 : vector<2x1xf32> to vector<2x128xf32>
    %13 = vector.broadcast %1 : vector<1x128xf32> to vector<2x128xf32>
    %14 = arith.mulf %12, %13 : vector<2x128xf32>
    %15 = vector.broadcast %2 : vector<1x128xf32> to vector<2x128xf32>
    %16 = arith.addf %14, %15 : vector<2x128xf32>
    %17 = math.tanh %16 : vector<2x128xf32>
    %18 = arith.negf %16 : vector<2x128xf32>
    %19 = math.exp %18 : vector<2x128xf32>
    %cst = arith.constant 1.000000e+00 : f32
    %20 = vector.broadcast %cst : f32 to vector<2x128xf32>
    %21 = arith.addf %20, %19 : vector<2x128xf32>
    %22 = arith.divf %20, %21 : vector<2x128xf32>
    %23 = arith.select %9, %17, %22 : vector<2x128xi1>, vector<2x128xf32>
    %24 = vector.extract_strided_slice %23 {offsets = [0, 0], sizes = [2, 32], strides = [1, 1]} : vector<2x128xf32> to vector<2x32xf32>
    %25 = vector.extract_strided_slice %23 {offsets = [0, 64], sizes = [2, 32], strides = [1, 1]} : vector<2x128xf32> to vector<2x32xf32>
    %26 = vector.extract_strided_slice %23 {offsets = [0, 96], sizes = [2, 32], strides = [1, 1]} : vector<2x128xf32> to vector<2x32xf32>
    %27 = arith.mulf %24, %25 : vector<2x32xf32>
    %28 = math.tanh %27 : vector<2x32xf32>
    %29 = arith.mulf %26, %28 : vector<2x32xf32>
    %30 = vector.extract_strided_slice %0 {offsets = [0, 1, 0], sizes = [2, 1, 1], strides = [1, 1, 1]} : vector<2x8x1xf32> to vector<2x1x1xf32>
    %31 = vector.shape_cast %30 : vector<2x1x1xf32> to vector<2x1xf32>
    %32 = vector.broadcast %31 : vector<2x1xf32> to vector<2x128xf32>
    %33 = vector.broadcast %1 : vector<1x128xf32> to vector<2x128xf32>
    %34 = arith.mulf %32, %33 : vector<2x128xf32>
    %35 = vector.broadcast %2 : vector<1x128xf32> to vector<2x128xf32>
    %36 = arith.addf %34, %35 : vector<2x128xf32>
    %cst_8 = arith.constant dense<0.000000e+00> : vector<2x128xf32>
    %37 = tpu.matmul %29, %3, %cst_8 {dimension_numbers = #tpu.dot_dimension_numbers<[1], [0], [0], [1], [0, 0, 1, 1], [], []>} : vector<2x32xf32>, vector<32x128xf32>, vector<2x128xf32> -> vector<2x128xf32>
    %38 = arith.addf %36, %37 : vector<2x128xf32>
    %39 = math.tanh %38 : vector<2x128xf32>
    %40 = arith.negf %38 : vector<2x128xf32>
    %41 = math.exp %40 : vector<2x128xf32>
    %cst_9 = arith.constant 1.000000e+00 : f32
    %42 = vector.broadcast %cst_9 : f32 to vector<2x128xf32>
    %43 = arith.addf %42, %41 : vector<2x128xf32>
    %44 = arith.divf %42, %43 : vector<2x128xf32>
    %45 = arith.select %9, %39, %44 : vector<2x128xi1>, vector<2x128xf32>
    %46 = vector.extract_strided_slice %45 {offsets = [0, 0], sizes = [2, 32], strides = [1, 1]} : vector<2x128xf32> to vector<2x32xf32>
    %47 = vector.extract_strided_slice %45 {offsets = [0, 32], sizes = [2, 32], strides = [1, 1]} : vector<2x128xf32> to vector<2x32xf32>
    %48 = vector.extract_strided_slice %45 {offsets = [0, 64], sizes = [2, 32], strides = [1, 1]} : vector<2x128xf32> to vector<2x32xf32>
    %49 = vector.extract_strided_slice %45 {offsets = [0, 96], sizes = [2, 32], strides = [1, 1]} : vector<2x128xf32> to vector<2x32xf32>
    %50 = arith.mulf %47, %27 : vector<2x32xf32>
    %51 = arith.mulf %46, %48 : vector<2x32xf32>
    %52 = arith.addf %50, %51 : vector<2x32xf32>
    %53 = math.tanh %52 : vector<2x32xf32>
    %54 = arith.mulf %49, %53 : vector<2x32xf32>
    %55 = vector.extract_strided_slice %0 {offsets = [0, 2, 0], sizes = [2, 1, 1], strides = [1, 1, 1]} : vector<2x8x1xf32> to vector<2x1x1xf32>
    %56 = vector.shape_cast %55 : vector<2x1x1xf32> to vector<2x1xf32>
    %57 = vector.broadcast %56 : vector<2x1xf32> to vector<2x128xf32>
    %58 = vector.broadcast %1 : vector<1x128xf32> to vector<2x128xf32>
    %59 = arith.mulf %57, %58 : vector<2x128xf32>
    %60 = vector.broadcast %2 : vector<1x128xf32> to vector<2x128xf32>
    %61 = arith.addf %59, %60 : vector<2x128xf32>
    %cst_10 = arith.constant dense<0.000000e+00> : vector<2x128xf32>
    %62 = tpu.matmul %54, %3, %cst_10 {dimension_numbers = #tpu.dot_dimension_numbers<[1], [0], [0], [1], [0, 0, 1, 1], [], []>} : vector<2x32xf32>, vector<32x128xf32>, vector<2x128xf32> -> vector<2x128xf32>
    %63 = arith.addf %61, %62 : vector<2x128xf32>
    %64 = math.tanh %63 : vector<2x128xf32>
    %65 = arith.negf %63 : vector<2x128xf32>
    %66 = math.exp %65 : vector<2x128xf32>
    %cst_11 = arith.constant 1.000000e+00 : f32
    %67 = vector.broadcast %cst_11 : f32 to vector<2x128xf32>
    %68 = arith.addf %67, %66 : vector<2x128xf32>
    %69 = arith.divf %67, %68 : vector<2x128xf32>
    %70 = arith.select %9, %64, %69 : vector<2x128xi1>, vector<2x128xf32>
    %71 = vector.extract_strided_slice %70 {offsets = [0, 0], sizes = [2, 32], strides = [1, 1]} : vector<2x128xf32> to vector<2x32xf32>
    %72 = vector.extract_strided_slice %70 {offsets = [0, 32], sizes = [2, 32], strides = [1, 1]} : vector<2x128xf32> to vector<2x32xf32>
    %73 = vector.extract_strided_slice %70 {offsets = [0, 64], sizes = [2, 32], strides = [1, 1]} : vector<2x128xf32> to vector<2x32xf32>
    %74 = vector.extract_strided_slice %70 {offsets = [0, 96], sizes = [2, 32], strides = [1, 1]} : vector<2x128xf32> to vector<2x32xf32>
    %75 = arith.mulf %72, %52 : vector<2x32xf32>
    %76 = arith.mulf %71, %73 : vector<2x32xf32>
    %77 = arith.addf %75, %76 : vector<2x32xf32>
    %78 = math.tanh %77 : vector<2x32xf32>
    %79 = arith.mulf %74, %78 : vector<2x32xf32>
    %80 = vector.extract_strided_slice %0 {offsets = [0, 3, 0], sizes = [2, 1, 1], strides = [1, 1, 1]} : vector<2x8x1xf32> to vector<2x1x1xf32>
    %81 = vector.shape_cast %80 : vector<2x1x1xf32> to vector<2x1xf32>
    %82 = vector.broadcast %81 : vector<2x1xf32> to vector<2x128xf32>
    %83 = vector.broadcast %1 : vector<1x128xf32> to vector<2x128xf32>
    %84 = arith.mulf %82, %83 : vector<2x128xf32>
    %85 = vector.broadcast %2 : vector<1x128xf32> to vector<2x128xf32>
    %86 = arith.addf %84, %85 : vector<2x128xf32>
    %cst_12 = arith.constant dense<0.000000e+00> : vector<2x128xf32>
    %87 = tpu.matmul %79, %3, %cst_12 {dimension_numbers = #tpu.dot_dimension_numbers<[1], [0], [0], [1], [0, 0, 1, 1], [], []>} : vector<2x32xf32>, vector<32x128xf32>, vector<2x128xf32> -> vector<2x128xf32>
    %88 = arith.addf %86, %87 : vector<2x128xf32>
    %89 = math.tanh %88 : vector<2x128xf32>
    %90 = arith.negf %88 : vector<2x128xf32>
    %91 = math.exp %90 : vector<2x128xf32>
    %cst_13 = arith.constant 1.000000e+00 : f32
    %92 = vector.broadcast %cst_13 : f32 to vector<2x128xf32>
    %93 = arith.addf %92, %91 : vector<2x128xf32>
    %94 = arith.divf %92, %93 : vector<2x128xf32>
    %95 = arith.select %9, %89, %94 : vector<2x128xi1>, vector<2x128xf32>
    %96 = vector.extract_strided_slice %95 {offsets = [0, 0], sizes = [2, 32], strides = [1, 1]} : vector<2x128xf32> to vector<2x32xf32>
    %97 = vector.extract_strided_slice %95 {offsets = [0, 32], sizes = [2, 32], strides = [1, 1]} : vector<2x128xf32> to vector<2x32xf32>
    %98 = vector.extract_strided_slice %95 {offsets = [0, 64], sizes = [2, 32], strides = [1, 1]} : vector<2x128xf32> to vector<2x32xf32>
    %99 = vector.extract_strided_slice %95 {offsets = [0, 96], sizes = [2, 32], strides = [1, 1]} : vector<2x128xf32> to vector<2x32xf32>
    %100 = arith.mulf %97, %77 : vector<2x32xf32>
    %101 = arith.mulf %96, %98 : vector<2x32xf32>
    %102 = arith.addf %100, %101 : vector<2x32xf32>
    %103 = math.tanh %102 : vector<2x32xf32>
    %104 = arith.mulf %99, %103 : vector<2x32xf32>
    %105 = vector.extract_strided_slice %0 {offsets = [0, 4, 0], sizes = [2, 1, 1], strides = [1, 1, 1]} : vector<2x8x1xf32> to vector<2x1x1xf32>
    %106 = vector.shape_cast %105 : vector<2x1x1xf32> to vector<2x1xf32>
    %107 = vector.broadcast %106 : vector<2x1xf32> to vector<2x128xf32>
    %108 = vector.broadcast %1 : vector<1x128xf32> to vector<2x128xf32>
    %109 = arith.mulf %107, %108 : vector<2x128xf32>
    %110 = vector.broadcast %2 : vector<1x128xf32> to vector<2x128xf32>
    %111 = arith.addf %109, %110 : vector<2x128xf32>
    %cst_14 = arith.constant dense<0.000000e+00> : vector<2x128xf32>
    %112 = tpu.matmul %104, %3, %cst_14 {dimension_numbers = #tpu.dot_dimension_numbers<[1], [0], [0], [1], [0, 0, 1, 1], [], []>} : vector<2x32xf32>, vector<32x128xf32>, vector<2x128xf32> -> vector<2x128xf32>
    %113 = arith.addf %111, %112 : vector<2x128xf32>
    %114 = math.tanh %113 : vector<2x128xf32>
    %115 = arith.negf %113 : vector<2x128xf32>
    %116 = math.exp %115 : vector<2x128xf32>
    %cst_15 = arith.constant 1.000000e+00 : f32
    %117 = vector.broadcast %cst_15 : f32 to vector<2x128xf32>
    %118 = arith.addf %117, %116 : vector<2x128xf32>
    %119 = arith.divf %117, %118 : vector<2x128xf32>
    %120 = arith.select %9, %114, %119 : vector<2x128xi1>, vector<2x128xf32>
    %121 = vector.extract_strided_slice %120 {offsets = [0, 0], sizes = [2, 32], strides = [1, 1]} : vector<2x128xf32> to vector<2x32xf32>
    %122 = vector.extract_strided_slice %120 {offsets = [0, 32], sizes = [2, 32], strides = [1, 1]} : vector<2x128xf32> to vector<2x32xf32>
    %123 = vector.extract_strided_slice %120 {offsets = [0, 64], sizes = [2, 32], strides = [1, 1]} : vector<2x128xf32> to vector<2x32xf32>
    %124 = vector.extract_strided_slice %120 {offsets = [0, 96], sizes = [2, 32], strides = [1, 1]} : vector<2x128xf32> to vector<2x32xf32>
    %125 = arith.mulf %122, %102 : vector<2x32xf32>
    %126 = arith.mulf %121, %123 : vector<2x32xf32>
    %127 = arith.addf %125, %126 : vector<2x32xf32>
    %128 = math.tanh %127 : vector<2x32xf32>
    %129 = arith.mulf %124, %128 : vector<2x32xf32>
    %130 = vector.extract_strided_slice %0 {offsets = [0, 5, 0], sizes = [2, 1, 1], strides = [1, 1, 1]} : vector<2x8x1xf32> to vector<2x1x1xf32>
    %131 = vector.shape_cast %130 : vector<2x1x1xf32> to vector<2x1xf32>
    %132 = vector.broadcast %131 : vector<2x1xf32> to vector<2x128xf32>
    %133 = vector.broadcast %1 : vector<1x128xf32> to vector<2x128xf32>
    %134 = arith.mulf %132, %133 : vector<2x128xf32>
    %135 = vector.broadcast %2 : vector<1x128xf32> to vector<2x128xf32>
    %136 = arith.addf %134, %135 : vector<2x128xf32>
    %cst_16 = arith.constant dense<0.000000e+00> : vector<2x128xf32>
    %137 = tpu.matmul %129, %3, %cst_16 {dimension_numbers = #tpu.dot_dimension_numbers<[1], [0], [0], [1], [0, 0, 1, 1], [], []>} : vector<2x32xf32>, vector<32x128xf32>, vector<2x128xf32> -> vector<2x128xf32>
    %138 = arith.addf %136, %137 : vector<2x128xf32>
    %139 = math.tanh %138 : vector<2x128xf32>
    %140 = arith.negf %138 : vector<2x128xf32>
    %141 = math.exp %140 : vector<2x128xf32>
    %cst_17 = arith.constant 1.000000e+00 : f32
    %142 = vector.broadcast %cst_17 : f32 to vector<2x128xf32>
    %143 = arith.addf %142, %141 : vector<2x128xf32>
    %144 = arith.divf %142, %143 : vector<2x128xf32>
    %145 = arith.select %9, %139, %144 : vector<2x128xi1>, vector<2x128xf32>
    %146 = vector.extract_strided_slice %145 {offsets = [0, 0], sizes = [2, 32], strides = [1, 1]} : vector<2x128xf32> to vector<2x32xf32>
    %147 = vector.extract_strided_slice %145 {offsets = [0, 32], sizes = [2, 32], strides = [1, 1]} : vector<2x128xf32> to vector<2x32xf32>
    %148 = vector.extract_strided_slice %145 {offsets = [0, 64], sizes = [2, 32], strides = [1, 1]} : vector<2x128xf32> to vector<2x32xf32>
    %149 = vector.extract_strided_slice %145 {offsets = [0, 96], sizes = [2, 32], strides = [1, 1]} : vector<2x128xf32> to vector<2x32xf32>
    %150 = arith.mulf %147, %127 : vector<2x32xf32>
    %151 = arith.mulf %146, %148 : vector<2x32xf32>
    %152 = arith.addf %150, %151 : vector<2x32xf32>
    %153 = math.tanh %152 : vector<2x32xf32>
    %154 = arith.mulf %149, %153 : vector<2x32xf32>
    %155 = vector.extract_strided_slice %0 {offsets = [0, 6, 0], sizes = [2, 1, 1], strides = [1, 1, 1]} : vector<2x8x1xf32> to vector<2x1x1xf32>
    %156 = vector.shape_cast %155 : vector<2x1x1xf32> to vector<2x1xf32>
    %157 = vector.broadcast %156 : vector<2x1xf32> to vector<2x128xf32>
    %158 = vector.broadcast %1 : vector<1x128xf32> to vector<2x128xf32>
    %159 = arith.mulf %157, %158 : vector<2x128xf32>
    %160 = vector.broadcast %2 : vector<1x128xf32> to vector<2x128xf32>
    %161 = arith.addf %159, %160 : vector<2x128xf32>
    %cst_18 = arith.constant dense<0.000000e+00> : vector<2x128xf32>
    %162 = tpu.matmul %154, %3, %cst_18 {dimension_numbers = #tpu.dot_dimension_numbers<[1], [0], [0], [1], [0, 0, 1, 1], [], []>} : vector<2x32xf32>, vector<32x128xf32>, vector<2x128xf32> -> vector<2x128xf32>
    %163 = arith.addf %161, %162 : vector<2x128xf32>
    %164 = math.tanh %163 : vector<2x128xf32>
    %165 = arith.negf %163 : vector<2x128xf32>
    %166 = math.exp %165 : vector<2x128xf32>
    %cst_19 = arith.constant 1.000000e+00 : f32
    %167 = vector.broadcast %cst_19 : f32 to vector<2x128xf32>
    %168 = arith.addf %167, %166 : vector<2x128xf32>
    %169 = arith.divf %167, %168 : vector<2x128xf32>
    %170 = arith.select %9, %164, %169 : vector<2x128xi1>, vector<2x128xf32>
    %171 = vector.extract_strided_slice %170 {offsets = [0, 0], sizes = [2, 32], strides = [1, 1]} : vector<2x128xf32> to vector<2x32xf32>
    %172 = vector.extract_strided_slice %170 {offsets = [0, 32], sizes = [2, 32], strides = [1, 1]} : vector<2x128xf32> to vector<2x32xf32>
    %173 = vector.extract_strided_slice %170 {offsets = [0, 64], sizes = [2, 32], strides = [1, 1]} : vector<2x128xf32> to vector<2x32xf32>
    %174 = vector.extract_strided_slice %170 {offsets = [0, 96], sizes = [2, 32], strides = [1, 1]} : vector<2x128xf32> to vector<2x32xf32>
    %175 = arith.mulf %172, %152 : vector<2x32xf32>
    %176 = arith.mulf %171, %173 : vector<2x32xf32>
    %177 = arith.addf %175, %176 : vector<2x32xf32>
    %178 = math.tanh %177 : vector<2x32xf32>
    %179 = arith.mulf %174, %178 : vector<2x32xf32>
    %180 = vector.extract_strided_slice %0 {offsets = [0, 7, 0], sizes = [2, 1, 1], strides = [1, 1, 1]} : vector<2x8x1xf32> to vector<2x1x1xf32>
    %181 = vector.shape_cast %180 : vector<2x1x1xf32> to vector<2x1xf32>
    %182 = vector.broadcast %181 : vector<2x1xf32> to vector<2x128xf32>
    %183 = vector.broadcast %1 : vector<1x128xf32> to vector<2x128xf32>
    %184 = arith.mulf %182, %183 : vector<2x128xf32>
    %185 = vector.broadcast %2 : vector<1x128xf32> to vector<2x128xf32>
    %186 = arith.addf %184, %185 : vector<2x128xf32>
    %cst_20 = arith.constant dense<0.000000e+00> : vector<2x128xf32>
    %187 = tpu.matmul %179, %3, %cst_20 {dimension_numbers = #tpu.dot_dimension_numbers<[1], [0], [0], [1], [0, 0, 1, 1], [], []>} : vector<2x32xf32>, vector<32x128xf32>, vector<2x128xf32> -> vector<2x128xf32>
    %188 = arith.addf %186, %187 : vector<2x128xf32>
    %189 = math.tanh %188 : vector<2x128xf32>
    %190 = arith.negf %188 : vector<2x128xf32>
    %191 = math.exp %190 : vector<2x128xf32>
    %cst_21 = arith.constant 1.000000e+00 : f32
    %192 = vector.broadcast %cst_21 : f32 to vector<2x128xf32>
    %193 = arith.addf %192, %191 : vector<2x128xf32>
    %194 = arith.divf %192, %193 : vector<2x128xf32>
    %195 = arith.select %9, %189, %194 : vector<2x128xi1>, vector<2x128xf32>
    %196 = vector.extract_strided_slice %195 {offsets = [0, 0], sizes = [2, 32], strides = [1, 1]} : vector<2x128xf32> to vector<2x32xf32>
    %197 = vector.extract_strided_slice %195 {offsets = [0, 32], sizes = [2, 32], strides = [1, 1]} : vector<2x128xf32> to vector<2x32xf32>
    %198 = vector.extract_strided_slice %195 {offsets = [0, 64], sizes = [2, 32], strides = [1, 1]} : vector<2x128xf32> to vector<2x32xf32>
    %199 = vector.extract_strided_slice %195 {offsets = [0, 96], sizes = [2, 32], strides = [1, 1]} : vector<2x128xf32> to vector<2x32xf32>
    %200 = arith.mulf %197, %177 : vector<2x32xf32>
    %201 = arith.mulf %196, %198 : vector<2x32xf32>
    %202 = arith.addf %200, %201 : vector<2x32xf32>
    %203 = math.tanh %202 : vector<2x32xf32>
    %204 = arith.mulf %199, %203 : vector<2x32xf32>
    %c0_22 = arith.constant 0 : index
    %c0_23 = arith.constant 0 : index
    %205 = vector.load %arg4[%c0_22, %c0_23] : memref<1x32xf32, #tpu.memory_space<vmem>>, vector<1x32xf32>
    %206 = vector.broadcast %205 : vector<1x32xf32> to vector<2x32xf32>
    %207 = arith.mulf %204, %206 : vector<2x32xf32>
    %cst_24 = arith.constant dense<0.000000e+00> : vector<2xf32>
    %208 = vector.multi_reduction <add>, %207, %cst_24 [1] : vector<2x32xf32> to vector<2xf32>
    %209 = vector.shape_cast %208 : vector<2xf32> to vector<2x1xf32>
    %c0_25 = arith.constant 0 : index
    %c0_26 = arith.constant 0 : index
    %210 = vector.load %arg5[%c0_25, %c0_26] : memref<1x1xf32, #tpu.memory_space<vmem>>, vector<1x1xf32>
    %211 = vector.broadcast %210 : vector<1x1xf32> to vector<2x1xf32>
    %212 = arith.addf %209, %211 : vector<2x1xf32>
    %c0_27 = arith.constant 0 : index
    %c0_28 = arith.constant 0 : index
    %213 = vector.load %arg6[%c0_27, %c0_28] : memref<2x1xf32, #tpu.memory_space<vmem>>, vector<2x1xf32>
    tpu.vector_store %arg6[%c0_27, %c0_28], %212 {strides = array<i32>} : memref<2x1xf32, #tpu.memory_space<vmem>>, vector<2x1xf32>,
    return
  }
}

</mosaic_0001>

<llo_original>
// kernel: model_forward.1
$region0: #{model_forward.1}
  #allocation0 [shape = 'u32[]', space=smem, size = 0x4, offset = 0x4, fixed_abs, tag = 'smem constant byte address 0x4 - core index']
  #allocation1 [shape = 'u32[144,128]{1,0:T(1,128)}', space=vmem, size = 0x12000, scoped, tag = 'internal scratch']
  #allocation2 [shape = 'f32[1,1]{1,0:T(1,128)S(1)}', space=vmem, size = 0x200, scoped, tag = 'scoped memory for model_forward.1']
  %s0 = inlined_call_operand.vmem [shape: f32[2,8,1], index: 0, kind: input, shape index: {}]
  %s1 = inlined_call_operand.vmem [shape: f32[1,128], index: 1, kind: input, shape index: {}]
  %s2 = inlined_call_operand.hbm [shape: f32[1,128], index: 2, kind: input, shape index: {}]
  %s3 = inlined_call_operand.vmem [shape: f32[32,128], index: 3, kind: input, shape index: {}]
  %s4 = inlined_call_operand.vmem [shape: f32[1,32], index: 4, kind: input, shape index: {}]
  %s5 = inlined_call_operand.<no memory space> [shape: f32[1,1], index: 5, kind: input, shape index: {}]
  %s6 = inlined_call_operand.vmem [shape: f32[2,1], index: 6, kind: output, shape index: {}]
  %s7 = sld [smem:[#allocation0]]
  $region38: #{model_forward.1} parent=0
    _
  %s9 = ssub.s32 1, %s7
  %s10 = scalar_select 0, %s9, %s7
  %v11 = vstv %s5
  %12 = vst [vmem:[#allocation2] sm:$0x1] %v11
  $region1: #{model_forward.1} parent=0
    #allocation3 [shape = 'u8[512]{0}', space=vmem, size = 0x400, scoped, tag = 'input window, operand 2, single buffered']
    #allocation4 [shape = 's32[1]{0}', space=sflag, size = 0x4, scoped, tag = 'scoped memory for model_forward.1']
    %13 = vsyncpa [#allocation4], 0
    // Predicated region
    $region2: #{model_forward.1} parent=1 // pred_check
      _
    $region3: #{model_forward.1} parent=1 // pred_check_branch
      %15 = sbr.rel (0) target = $region5
    $region4: #{model_forward.1} parent=1 // pred_region
      _
    $region5: #{model_forward.1} parent=1 // pred_fallthru
      _
    // Predicated region
    $region6: #{model_forward.1} parent=1 // pred_check
      _
    $region7: #{model_forward.1} parent=1 // pred_check_branch
      %17 = sbr.rel (0) target = $region9
    $region8: #{model_forward.1} parent=1 // pred_region
      _
    $region9: #{model_forward.1} parent=1 // pred_fallthru
      _
    // Predicated region
    $region10: #{model_forward.1} parent=1 // pred_check
      _
    $region11: #{model_forward.1} parent=1 // pred_check_branch
      %19 = sbr.rel (0) target = $region13
    $region12: #{model_forward.1} parent=1 // pred_region
      %s21 = ssub.s32 16, 16
      %22 = vsyncadd [#allocation4], %s21
      %s24 = sshll.u32 [#allocation3], 4
      %s25 = int_to_ptr.vmem [resolvable:$true] %s24
      %27 = dma.hbm_to_vmem [thread:$0]  %s2, 16, %s25, [#allocation4]
    $region13: #{model_forward.1} parent=1 // pred_fallthru
      _
    // Predicated region
    $region14: #{model_forward.1} parent=1 // pred_check
      _
    $region15: #{model_forward.1} parent=1 // pred_check_branch
      %29 = sbr.rel (0) target = $region17
    $region16: #{model_forward.1} parent=1 // pred_region
      _
    $region17: #{model_forward.1} parent=1 // pred_fallthru
      _
    // Predicated region
    $region18: #{model_forward.1} parent=1 // pred_check
      _
    $region19: #{model_forward.1} parent=1 // pred_check_branch
      %31 = sbr.rel (0) target = $region21
    $region20: #{model_forward.1} parent=1 // pred_region
      _
    $region21: #{model_forward.1} parent=1 // pred_fallthru
      _
    // Predicated region
    $region22: #{model_forward.1} parent=1 // pred_check
      _
    $region23: #{model_forward.1} parent=1 // pred_check_branch
      %33 = sbr.rel (0) target = $region25
    $region24: #{model_forward.1} parent=1 // pred_region
      _
    $region25: #{model_forward.1} parent=1 // pred_fallthru
      _
    // Predicated region
    $region26: #{model_forward.1} parent=1 // pred_check
      _
    $region27: #{model_forward.1} parent=1 // pred_check_branch
      %35 = sbr.rel (0) target = $region29
    $region28: #{model_forward.1} parent=1 // pred_region
      %36 = dma.done [#allocation4], 16
    $region29: #{model_forward.1} parent=1 // pred_fallthru
      _
    %v37 = vld [vmem:[%s0] sm:$0xff]
    %v38 = vld [vmem:[%s0 + $0x8] sm:$0xff]
    %v39 = vld [vmem:[%s1] sm:$0x1]
    %v40 = vld [vmem:[#allocation3] sm:$0x1]
    %v41 = vld [vmem:[%s3] sm:$0xff]
    %v42 = vld [vmem:[%s3 + $0x8] sm:$0xff]
    %v43 = vld [vmem:[%s3 + $0x10] sm:$0xff]
    %v44 = vld [vmem:[%s3 + $0x18] sm:$0xff]
    %v45 = vlaneseq
    %v46 = vand.u32 %v45, 127
    %vm47 = vcmp.ge.s32.totalorder %v46, 64
    %vm48 = vcmp.lt.s32.totalorder %v46, 96
    %vm49 = vmand %vm47, %vm48
    %51 = vset.pattern.permute.xlu0 0
    %52 = vperm.xlu0 %51, %v37
    %v53 = vpop.permute.xlu0 %52
    %56 = vset.pattern.permute.xlu0 0
    %57 = vperm.xlu0 %56, %v38
    %v58 = vpop.permute.xlu0 %57
    %v61 = vlaneseq
    %v62 = vshrl.u32 %v61, 7
    %v63 = vsub.s32 0, %v62
    %v64 = vrot.slane %v39, %v63
    %v66 = vmul.f32 %v53, %v64
    %v67 = vmul.f32 %v58, %v64
    %v69 = vlaneseq
    %v70 = vshrl.u32 %v69, 7
    %v71 = vsub.s32 0, %v70
    %v72 = vrot.slane %v40, %v71
    %v74 = vadd.f32 %v66, %v72
    %v75 = vadd.f32 %v67, %v72
    %v76 = vtanh.pop %v74
    %v77 = vtanh.pop %v75
    %v78 = vxor.u32 %v74, 2147483648
    %v79 = vxor.u32 %v75, 2147483648
    %v80 = vmul.f32 %v78, 1.442695
    %v81 = vpow.pop %v80
    %v82 = vmul.f32 %v79, 1.442695
    %v83 = vpow.pop %v82
    %v84 = vadd.f32 %v81, 1.0
    %v85 = vadd.f32 %v83, 1.0
    %v86 = vrcp.pop %v84
    %v87 = vmul.f32 1.0, %v86
    %v88 = vrcp.pop %v85
    %v89 = vmul.f32 1.0, %v88
    %v92 = vrot.slane %v77, 7
    %vm93 = vcmask 1041409
    %v94 = vsel %vm93, %v92, %v76
    %v98 = vrot.slane %v89, 7
    %v99 = vsel %vm93, %v98, %v87
    %v101 = vsel %vm49, %v94, %v99
    %103 = vrot.lane.b32.xlu0 %v101, 64
    %v104 = vpop.permute.xlu0 %103
    %v106 = vmul.f32 %v101, %v104
    %v107 = vtanh.pop %v106
    %109 = vrot.lane.b32.xlu0 %v107, 96
    %v110 = vpop.permute.xlu0 %109
    %v112 = vmul.f32 %v101, %v110
    %114 = vrot.lane.b32.xlu0 %v112, 32
    %v115 = vpop.permute.xlu0 %114
    %vm116 = vcmask 261120
    %v117 = vsel %vm116, %v115, 0
    %119 = vmatprep.subr.mxu0 0.0
    %120 = vmatpush1.msra.mxu0 %v41
    %121 = vmatprep.subr.mxu0 0.0
    %122 = vmatpush1.msra.mxu0 %v42
    %123 = vmatprep.subr.mxu0 0.0
    %124 = vmatpush1.msra.mxu0 %v43
    %125 = vmatprep.subr.mxu0 0.0
    %126 = vmatpush1.msra.mxu0 %v44
    %127 = vmatprep.subr.mxu0 0.0
    %128 = vmatpush1.msra.mxu0 0.0
    %129 = vmatprep.subr.mxu0 0.0
    %130 = vmatpush1.msra.mxu0 0.0
    %131 = vmatprep.subr.mxu0 0.0
    %132 = vmatpush1.msra.mxu0 0.0
    %133 = vmatprep.subr.mxu0 0.0
    %134 = vmatpush1.msra.mxu0 0.0
    %135 = vmatprep.subr.mxu0 0.0
    %136 = vmatpush1.msra.mxu0 0.0
    %137 = vmatprep.subr.mxu0 0.0
    %138 = vmatpush1.msra.mxu0 0.0
    %139 = vmatprep.subr.mxu0 0.0
    %140 = vmatpush1.msra.mxu0 0.0
    %141 = vmatprep.subr.mxu0 0.0
    %142 = vmatpush1.msra.mxu0 0.0
    %143 = vmatprep.subr.mxu0 0.0
    %144 = vmatpush1.msra.mxu0 0.0
    %145 = vmatprep.subr.mxu0 0.0
    %146 = vmatpush1.msra.mxu0 0.0
    %147 = vmatprep.subr.mxu0 0.0
    %148 = vmatpush1.msra.mxu0 0.0
    %149 = vmatprep.subr.mxu0 0.0
    %150 = vmatpush1.msra.mxu0 0.0
    %151 = vmatprep.subr.mxu0 0.0
    %152 = vmatpush1.msra.mxu0 0.0
    %153 = vmatprep.subr.mxu0 0.0
    %154 = vmatpush1.msra.mxu0 0.0
    %155 = vmatprep.subr.mxu0 0.0
    %156 = vmatpush1.msra.mxu0 0.0
    %157 = vmatprep.subr.mxu0 0.0
    %158 = vmatpush1.msra.mxu0 0.0
    %159 = vmatprep.subr.mxu0 0.0
    %160 = vmatpush1.msra.mxu0 0.0
    %161 = vmatprep.subr.mxu0 0.0
    %162 = vmatpush1.msra.mxu0 0.0
    %163 = vmatprep.subr.mxu0 0.0
    %164 = vmatpush1.msra.mxu0 0.0
    %165 = vmatprep.subr.mxu0 0.0
    %166 = vmatpush1.msra.mxu0 0.0
    %167 = vmatprep.subr.mxu0 0.0
    %168 = vmatpush1.msra.mxu0 0.0
    %169 = vmatprep.subr.mxu0 0.0
    %170 = vmatpush1.msra.mxu0 0.0
    %171 = vmatprep.subr.mxu0 0.0
    %172 = vmatpush1.msra.mxu0 0.0
    %173 = vmatprep.subr.mxu0 0.0
    %174 = vmatpush1.msra.mxu0 0.0
    %175 = vmatprep.subr.mxu0 0.0
    %176 = vmatpush1.msra.mxu0 0.0
    %177 = vmatprep.subr.mxu0 0.0
    %178 = vmatpush1.msra.mxu0 0.0
    %179 = vmatprep.subr.mxu0 0.0
    %180 = vmatpush1.msra.mxu0 0.0
    %181 = vmatprep.subr.mxu0 0.0
    %182 = vmatpush1.msra.mxu0 0.0
    %183 = vmatprep.mubr.f32.mxu0 0.0
    %184 = vmatmul.mubr.f32.gmra.mrb[0].mxu0 %v117
    %v185 = vpop.f32.mrb[0].mxu0
    %v186 = vadd.f32 0.0, %v185
    %v187 = vpop.f32.mrb[0].mxu0
    %188 = vdwg.mxu0
    %v190 = vrot.slane %v186, 7
    %v193 = vadd.f32 %v74, %v190
    %v194 = vadd.f32 %v75, %v186
    %v195 = vtanh.pop %v193
    %v196 = vtanh.pop %v194
    %v197 = vxor.u32 %v193, 2147483648
    %v198 = vxor.u32 %v194, 2147483648
    %v199 = vmul.f32 %v197, 1.442695
    %v200 = vpow.pop %v199
    %v201 = vmul.f32 %v198, 1.442695
    %v202 = vpow.pop %v201
    %v203 = vadd.f32 %v200, 1.0
    %v204 = vadd.f32 %v202, 1.0
    %v205 = vrcp.pop %v203
    %v206 = vmul.f32 1.0, %v205
    %v207 = vrcp.pop %v204
    %v208 = vmul.f32 1.0, %v207
    %v211 = vrot.slane %v195, 1
    %v212 = vsel %vm93, %v196, %v211
    %v216 = vrot.slane %v206, 1
    %v217 = vsel %vm93, %v208, %v216
    %v219 = vsel %vm49, %v212, %v217
    %221 = vrot.lane.b32.xlu0 %v106, 32
    %v222 = vpop.permute.xlu0 %221
    %v224 = vmul.f32 %v219, %v222
    %226 = vrot.lane.b32.xlu0 %v219, 64
    %v227 = vpop.permute.xlu0 %226
    %v229 = vmul.f32 %v219, %v227
    %231 = vrot.lane.b32.xlu0 %v229, 32
    %v232 = vpop.permute.xlu0 %231
    %v234 = vadd.f32 %v224, %v232
    %v235 = vtanh.pop %v234
    %237 = vrot.lane.b32.xlu0 %v235, 64
    %v238 = vpop.permute.xlu0 %237
    %v240 = vmul.f32 %v219, %v238
    %242 = vrot.lane.b32.xlu0 %v240, 32
    %v243 = vpop.permute.xlu0 %242
    %v244 = vsel %vm116, %v243, 0
    %246 = vmatprep.subr.mxu0 0.0
    %247 = vmatpush1.msra.mxu0 %v41
    %248 = vmatprep.subr.mxu0 0.0
    %249 = vmatpush1.msra.mxu0 %v42
    %250 = vmatprep.subr.mxu0 0.0
    %251 = vmatpush1.msra.mxu0 %v43
    %252 = vmatprep.subr.mxu0 0.0
    %253 = vmatpush1.msra.mxu0 %v44
    %254 = vmatprep.subr.mxu0 0.0
    %255 = vmatpush1.msra.mxu0 0.0
    %256 = vmatprep.subr.mxu0 0.0
    %257 = vmatpush1.msra.mxu0 0.0
    %258 = vmatprep.subr.mxu0 0.0
    %259 = vmatpush1.msra.mxu0 0.0
    %260 = vmatprep.subr.mxu0 0.0
    %261 = vmatpush1.msra.mxu0 0.0
    %262 = vmatprep.subr.mxu0 0.0
    %263 = vmatpush1.msra.mxu0 0.0
    %264 = vmatprep.subr.mxu0 0.0
    %265 = vmatpush1.msra.mxu0 0.0
    %266 = vmatprep.subr.mxu0 0.0
    %267 = vmatpush1.msra.mxu0 0.0
    %268 = vmatprep.subr.mxu0 0.0
    %269 = vmatpush1.msra.mxu0 0.0
    %270 = vmatprep.subr.mxu0 0.0
    %271 = vmatpush1.msra.mxu0 0.0
    %272 = vmatprep.subr.mxu0 0.0
    %273 = vmatpush1.msra.mxu0 0.0
    %274 = vmatprep.subr.mxu0 0.0
    %275 = vmatpush1.msra.mxu0 0.0
    %276 = vmatprep.subr.mxu0 0.0
    %277 = vmatpush1.msra.mxu0 0.0
    %278 = vmatprep.subr.mxu0 0.0
    %279 = vmatpush1.msra.mxu0 0.0
    %280 = vmatprep.subr.mxu0 0.0
    %281 = vmatpush1.msra.mxu0 0.0
    %282 = vmatprep.subr.mxu0 0.0
    %283 = vmatpush1.msra.mxu0 0.0
    %284 = vmatprep.subr.mxu0 0.0
    %285 = vmatpush1.msra.mxu0 0.0
    %286 = vmatprep.subr.mxu0 0.0
    %287 = vmatpush1.msra.mxu0 0.0
    %288 = vmatprep.subr.mxu0 0.0
    %289 = vmatpush1.msra.mxu0 0.0
    %290 = vmatprep.subr.mxu0 0.0
    %291 = vmatpush1.msra.mxu0 0.0
    %292 = vmatprep.subr.mxu0 0.0
    %293 = vmatpush1.msra.mxu0 0.0
    %294 = vmatprep.subr.mxu0 0.0
    %295 = vmatpush1.msra.mxu0 0.0
    %296 = vmatprep.subr.mxu0 0.0
    %297 = vmatpush1.msra.mxu0 0.0
    %298 = vmatprep.subr.mxu0 0.0
    %299 = vmatpush1.msra.mxu0 0.0
    %300 = vmatprep.subr.mxu0 0.0
    %301 = vmatpush1.msra.mxu0 0.0
    %302 = vmatprep.subr.mxu0 0.0
    %303 = vmatpush1.msra.mxu0 0.0
    %304 = vmatprep.subr.mxu0 0.0
    %305 = vmatpush1.msra.mxu0 0.0
    %306 = vmatprep.subr.mxu0 0.0
    %307 = vmatpush1.msra.mxu0 0.0
    %308 = vmatprep.subr.mxu0 0.0
    %309 = vmatpush1.msra.mxu0 0.0
    %310 = vmatprep.mubr.f32.mxu0 0.0
    %311 = vmatmul.mubr.f32.gmra.mrb[0].mxu0 %v244
    %v312 = vpop.f32.mrb[0].mxu0
    %v313 = vadd.f32 0.0, %v312
    %v314 = vpop.f32.mrb[0].mxu0
    %315 = vdwg.mxu0
    %v317 = vrot.slane %v313, 6
    %v318 = vrot.slane %v313, 7
    %v321 = vadd.f32 %v74, %v317
    %v322 = vadd.f32 %v75, %v318
    %v323 = vtanh.pop %v321
    %v324 = vtanh.pop %v322
    %v325 = vxor.u32 %v321, 2147483648
    %v326 = vxor.u32 %v322, 2147483648
    %v327 = vmul.f32 %v325, 1.442695
    %v328 = vpow.pop %v327
    %v329 = vmul.f32 %v326, 1.442695
    %v330 = vpow.pop %v329
    %v331 = vadd.f32 %v328, 1.0
    %v332 = vadd.f32 %v330, 1.0
    %v333 = vrcp.pop %v331
    %v334 = vmul.f32 1.0, %v333
    %v335 = vrcp.pop %v332
    %v336 = vmul.f32 1.0, %v335
    %v339 = vrot.slane %v323, 2
    %v340 = vrot.slane %v324, 1
    %v341 = vsel %vm93, %v340, %v339
    %v345 = vrot.slane %v334, 2
    %v346 = vrot.slane %v336, 1
    %v347 = vsel %vm93, %v346, %v345
    %v349 = vsel %vm49, %v341, %v347
    %v350 = vmul.f32 %v349, %v234
    %352 = vrot.lane.b32.xlu0 %v349, 64
    %v353 = vpop.permute.xlu0 %352
    %v355 = vmul.f32 %v349, %v353
    %357 = vrot.lane.b32.xlu0 %v355, 32
    %v358 = vpop.permute.xlu0 %357
    %v360 = vadd.f32 %v350, %v358
    %v361 = vtanh.pop %v360
    %363 = vrot.lane.b32.xlu0 %v361, 64
    %v364 = vpop.permute.xlu0 %363
    %v366 = vmul.f32 %v349, %v364
    %368 = vrot.lane.b32.xlu0 %v366, 32
    %v369 = vpop.permute.xlu0 %368
    %v370 = vsel %vm116, %v369, 0
    %372 = vmatprep.subr.mxu0 0.0
    %373 = vmatpush1.msra.mxu0 %v41
    %374 = vmatprep.subr.mxu0 0.0
    %375 = vmatpush1.msra.mxu0 %v42
    %376 = vmatprep.subr.mxu0 0.0
    %377 = vmatpush1.msra.mxu0 %v43
    %378 = vmatprep.subr.mxu0 0.0
    %379 = vmatpush1.msra.mxu0 %v44
    %380 = vmatprep.subr.mxu0 0.0
    %381 = vmatpush1.msra.mxu0 0.0
    %382 = vmatprep.subr.mxu0 0.0
    %383 = vmatpush1.msra.mxu0 0.0
    %384 = vmatprep.subr.mxu0 0.0
    %385 = vmatpush1.msra.mxu0 0.0
    %386 = vmatprep.subr.mxu0 0.0
    %387 = vmatpush1.msra.mxu0 0.0
    %388 = vmatprep.subr.mxu0 0.0
    %389 = vmatpush1.msra.mxu0 0.0
    %390 = vmatprep.subr.mxu0 0.0
    %391 = vmatpush1.msra.mxu0 0.0
    %392 = vmatprep.subr.mxu0 0.0
    %393 = vmatpush1.msra.mxu0 0.0
    %394 = vmatprep.subr.mxu0 0.0
    %395 = vmatpush1.msra.mxu0 0.0
    %396 = vmatprep.subr.mxu0 0.0
    %397 = vmatpush1.msra.mxu0 0.0
    %398 = vmatprep.subr.mxu0 0.0
    %399 = vmatpush1.msra.mxu0 0.0
    %400 = vmatprep.subr.mxu0 0.0
    %401 = vmatpush1.msra.mxu0 0.0
    %402 = vmatprep.subr.mxu0 0.0
    %403 = vmatpush1.msra.mxu0 0.0
    %404 = vmatprep.subr.mxu0 0.0
    %405 = vmatpush1.msra.mxu0 0.0
    %406 = vmatprep.subr.mxu0 0.0
    %407 = vmatpush1.msra.mxu0 0.0
    %408 = vmatprep.subr.mxu0 0.0
    %409 = vmatpush1.msra.mxu0 0.0
    %410 = vmatprep.subr.mxu0 0.0
    %411 = vmatpush1.msra.mxu0 0.0
    %412 = vmatprep.subr.mxu0 0.0
    %413 = vmatpush1.msra.mxu0 0.0
    %414 = vmatprep.subr.mxu0 0.0
    %415 = vmatpush1.msra.mxu0 0.0
    %416 = vmatprep.subr.mxu0 0.0
    %417 = vmatpush1.msra.mxu0 0.0
    %418 = vmatprep.subr.mxu0 0.0
    %419 = vmatpush1.msra.mxu0 0.0
    %420 = vmatprep.subr.mxu0 0.0
    %421 = vmatpush1.msra.mxu0 0.0
    %422 = vmatprep.subr.mxu0 0.0
    %423 = vmatpush1.msra.mxu0 0.0
    %424 = vmatprep.subr.mxu0 0.0
    %425 = vmatpush1.msra.mxu0 0.0
    %426 = vmatprep.subr.mxu0 0.0
    %427 = vmatpush1.msra.mxu0 0.0
    %428 = vmatprep.subr.mxu0 0.0
    %429 = vmatpush1.msra.mxu0 0.0
    %430 = vmatprep.subr.mxu0 0.0
    %431 = vmatpush1.msra.mxu0 0.0
    %432 = vmatprep.subr.mxu0 0.0
    %433 = vmatpush1.msra.mxu0 0.0
    %434 = vmatprep.subr.mxu0 0.0
    %435 = vmatpush1.msra.mxu0 0.0
    %436 = vmatprep.mubr.f32.mxu0 0.0
    %437 = vmatmul.mubr.f32.gmra.mrb[0].mxu0 %v370
    %v438 = vpop.f32.mrb[0].mxu0
    %v439 = vadd.f32 0.0, %v438
    %v440 = vpop.f32.mrb[0].mxu0
    %441 = vdwg.mxu0
    %v443 = vrot.slane %v439, 5
    %v444 = vrot.slane %v439, 6
    %v447 = vadd.f32 %v74, %v443
    %v448 = vadd.f32 %v75, %v444
    %v449 = vtanh.pop %v447
    %v450 = vtanh.pop %v448
    %v451 = vxor.u32 %v447, 2147483648
    %v452 = vxor.u32 %v448, 2147483648
    %v453 = vmul.f32 %v451, 1.442695
    %v454 = vpow.pop %v453
    %v455 = vmul.f32 %v452, 1.442695
    %v456 = vpow.pop %v455
    %v457 = vadd.f32 %v454, 1.0
    %v458 = vadd.f32 %v456, 1.0
    %v459 = vrcp.pop %v457
    %v460 = vmul.f32 1.0, %v459
    %v461 = vrcp.pop %v458
    %v462 = vmul.f32 1.0, %v461
    %v465 = vrot.slane %v449, 3
    %v466 = vrot.slane %v450, 2
    %v467 = vsel %vm93, %v466, %v465
    %v471 = vrot.slane %v460, 3
    %v472 = vrot.slane %v462, 2
    %v473 = vsel %vm93, %v472, %v471
    %v475 = vsel %vm49, %v467, %v473
    %v476 = vmul.f32 %v475, %v360
    %478 = vrot.lane.b32.xlu0 %v475, 64
    %v479 = vpop.permute.xlu0 %478
    %v481 = vmul.f32 %v475, %v479
    %483 = vrot.lane.b32.xlu0 %v481, 32
    %v484 = vpop.permute.xlu0 %483
    %v486 = vadd.f32 %v476, %v484
    %v487 = vtanh.pop %v486
    %489 = vrot.lane.b32.xlu0 %v487, 64
    %v490 = vpop.permute.xlu0 %489
    %v492 = vmul.f32 %v475, %v490
    %494 = vrot.lane.b32.xlu0 %v492, 32
    %v495 = vpop.permute.xlu0 %494
    %v496 = vsel %vm116, %v495, 0
    %498 = vmatprep.subr.mxu0 0.0
    %499 = vmatpush1.msra.mxu0 %v41
    %500 = vmatprep.subr.mxu0 0.0
    %501 = vmatpush1.msra.mxu0 %v42
    %502 = vmatprep.subr.mxu0 0.0
    %503 = vmatpush1.msra.mxu0 %v43
    %504 = vmatprep.subr.mxu0 0.0
    %505 = vmatpush1.msra.mxu0 %v44
    %506 = vmatprep.subr.mxu0 0.0
    %507 = vmatpush1.msra.mxu0 0.0
    %508 = vmatprep.subr.mxu0 0.0
    %509 = vmatpush1.msra.mxu0 0.0
    %510 = vmatprep.subr.mxu0 0.0
    %511 = vmatpush1.msra.mxu0 0.0
    %512 = vmatprep.subr.mxu0 0.0
    %513 = vmatpush1.msra.mxu0 0.0
    %514 = vmatprep.subr.mxu0 0.0
    %515 = vmatpush1.msra.mxu0 0.0
    %516 = vmatprep.subr.mxu0 0.0
    %517 = vmatpush1.msra.mxu0 0.0
    %518 = vmatprep.subr.mxu0 0.0
    %519 = vmatpush1.msra.mxu0 0.0
    %520 = vmatprep.subr.mxu0 0.0
    %521 = vmatpush1.msra.mxu0 0.0
    %522 = vmatprep.subr.mxu0 0.0
    %523 = vmatpush1.msra.mxu0 0.0
    %524 = vmatprep.subr.mxu0 0.0
    %525 = vmatpush1.msra.mxu0 0.0
    %526 = vmatprep.subr.mxu0 0.0
    %527 = vmatpush1.msra.mxu0 0.0
    %528 = vmatprep.subr.mxu0 0.0
    %529 = vmatpush1.msra.mxu0 0.0
    %530 = vmatprep.subr.mxu0 0.0
    %531 = vmatpush1.msra.mxu0 0.0
    %532 = vmatprep.subr.mxu0 0.0
    %533 = vmatpush1.msra.mxu0 0.0
    %534 = vmatprep.subr.mxu0 0.0
    %535 = vmatpush1.msra.mxu0 0.0
    %536 = vmatprep.subr.mxu0 0.0
    %537 = vmatpush1.msra.mxu0 0.0
    %538 = vmatprep.subr.mxu0 0.0
    %539 = vmatpush1.msra.mxu0 0.0
    %540 = vmatprep.subr.mxu0 0.0
    %541 = vmatpush1.msra.mxu0 0.0
    %542 = vmatprep.subr.mxu0 0.0
    %543 = vmatpush1.msra.mxu0 0.0
    %544 = vmatprep.subr.mxu0 0.0
    %545 = vmatpush1.msra.mxu0 0.0
    %546 = vmatprep.subr.mxu0 0.0
    %547 = vmatpush1.msra.mxu0 0.0
    %548 = vmatprep.subr.mxu0 0.0
    %549 = vmatpush1.msra.mxu0 0.0
    %550 = vmatprep.subr.mxu0 0.0
    %551 = vmatpush1.msra.mxu0 0.0
    %552 = vmatprep.subr.mxu0 0.0
    %553 = vmatpush1.msra.mxu0 0.0
    %554 = vmatprep.subr.mxu0 0.0
    %555 = vmatpush1.msra.mxu0 0.0
    %556 = vmatprep.subr.mxu0 0.0
    %557 = vmatpush1.msra.mxu0 0.0
    %558 = vmatprep.subr.mxu0 0.0
    %559 = vmatpush1.msra.mxu0 0.0
    %560 = vmatprep.subr.mxu0 0.0
    %561 = vmatpush1.msra.mxu0 0.0
    %562 = vmatprep.mubr.f32.mxu0 0.0
    %563 = vmatmul.mubr.f32.gmra.mrb[0].mxu0 %v496
    %v564 = vpop.f32.mrb[0].mxu0
    %v565 = vadd.f32 0.0, %v564
    %v566 = vpop.f32.mrb[0].mxu0
    %567 = vdwg.mxu0
    %v569 = vrot.slane %v565, 4
    %v570 = vrot.slane %v565, 5
    %v573 = vadd.f32 %v74, %v569
    %v574 = vadd.f32 %v75, %v570
    %v575 = vtanh.pop %v573
    %v576 = vtanh.pop %v574
    %v577 = vxor.u32 %v573, 2147483648
    %v578 = vxor.u32 %v574, 2147483648
    %v579 = vmul.f32 %v577, 1.442695
    %v580 = vpow.pop %v579
    %v581 = vmul.f32 %v578, 1.442695
    %v582 = vpow.pop %v581
    %v583 = vadd.f32 %v580, 1.0
    %v584 = vadd.f32 %v582, 1.0
    %v585 = vrcp.pop %v583
    %v586 = vmul.f32 1.0, %v585
    %v587 = vrcp.pop %v584
    %v588 = vmul.f32 1.0, %v587
    %v591 = vrot.slane %v575, 4
    %v592 = vrot.slane %v576, 3
    %v593 = vsel %vm93, %v592, %v591
    %v597 = vrot.slane %v586, 4
    %v598 = vrot.slane %v588, 3
    %v599 = vsel %vm93, %v598, %v597
    %v601 = vsel %vm49, %v593, %v599
    %v602 = vmul.f32 %v601, %v486
    %604 = vrot.lane.b32.xlu0 %v601, 64
    %v605 = vpop.permute.xlu0 %604
    %v607 = vmul.f32 %v601, %v605
    %609 = vrot.lane.b32.xlu0 %v607, 32
    %v610 = vpop.permute.xlu0 %609
    %v612 = vadd.f32 %v602, %v610
    %v613 = vtanh.pop %v612
    %615 = vrot.lane.b32.xlu0 %v613, 64
    %v616 = vpop.permute.xlu0 %615
    %v618 = vmul.f32 %v601, %v616
    %620 = vrot.lane.b32.xlu0 %v618, 32
    %v621 = vpop.permute.xlu0 %620
    %v622 = vsel %vm116, %v621, 0
    %624 = vmatprep.subr.mxu0 0.0
    %625 = vmatpush1.msra.mxu0 %v41
    %626 = vmatprep.subr.mxu0 0.0
    %627 = vmatpush1.msra.mxu0 %v42
    %628 = vmatprep.subr.mxu0 0.0
    %629 = vmatpush1.msra.mxu0 %v43
    %630 = vmatprep.subr.mxu0 0.0
    %631 = vmatpush1.msra.mxu0 %v44
    %632 = vmatprep.subr.mxu0 0.0
    %633 = vmatpush1.msra.mxu0 0.0
    %634 = vmatprep.subr.mxu0 0.0
    %635 = vmatpush1.msra.mxu0 0.0
    %636 = vmatprep.subr.mxu0 0.0
    %637 = vmatpush1.msra.mxu0 0.0
    %638 = vmatprep.subr.mxu0 0.0
    %639 = vmatpush1.msra.mxu0 0.0
    %640 = vmatprep.subr.mxu0 0.0
    %641 = vmatpush1.msra.mxu0 0.0
    %642 = vmatprep.subr.mxu0 0.0
    %643 = vmatpush1.msra.mxu0 0.0
    %644 = vmatprep.subr.mxu0 0.0
    %645 = vmatpush1.msra.mxu0 0.0
    %646 = vmatprep.subr.mxu0 0.0
    %647 = vmatpush1.msra.mxu0 0.0
    %648 = vmatprep.subr.mxu0 0.0
    %649 = vmatpush1.msra.mxu0 0.0
    %650 = vmatprep.subr.mxu0 0.0
    %651 = vmatpush1.msra.mxu0 0.0
    %652 = vmatprep.subr.mxu0 0.0
    %653 = vmatpush1.msra.mxu0 0.0
    %654 = vmatprep.subr.mxu0 0.0
    %655 = vmatpush1.msra.mxu0 0.0
    %656 = vmatprep.subr.mxu0 0.0
    %657 = vmatpush1.msra.mxu0 0.0
    %658 = vmatprep.subr.mxu0 0.0
    %659 = vmatpush1.msra.mxu0 0.0
    %660 = vmatprep.subr.mxu0 0.0
    %661 = vmatpush1.msra.mxu0 0.0
    %662 = vmatprep.subr.mxu0 0.0
    %663 = vmatpush1.msra.mxu0 0.0
    %664 = vmatprep.subr.mxu0 0.0
    %665 = vmatpush1.msra.mxu0 0.0
    %666 = vmatprep.subr.mxu0 0.0
    %667 = vmatpush1.msra.mxu0 0.0
    %668 = vmatprep.subr.mxu0 0.0
    %669 = vmatpush1.msra.mxu0 0.0
    %670 = vmatprep.subr.mxu0 0.0
    %671 = vmatpush1.msra.mxu0 0.0
    %672 = vmatprep.subr.mxu0 0.0
    %673 = vmatpush1.msra.mxu0 0.0
    %674 = vmatprep.subr.mxu0 0.0
    %675 = vmatpush1.msra.mxu0 0.0
    %676 = vmatprep.subr.mxu0 0.0
    %677 = vmatpush1.msra.mxu0 0.0
    %678 = vmatprep.subr.mxu0 0.0
    %679 = vmatpush1.msra.mxu0 0.0
    %680 = vmatprep.subr.mxu0 0.0
    %681 = vmatpush1.msra.mxu0 0.0
    %682 = vmatprep.subr.mxu0 0.0
    %683 = vmatpush1.msra.mxu0 0.0
    %684 = vmatprep.subr.mxu0 0.0
    %685 = vmatpush1.msra.mxu0 0.0
    %686 = vmatprep.subr.mxu0 0.0
    %687 = vmatpush1.msra.mxu0 0.0
    %688 = vmatprep.mubr.f32.mxu0 0.0
    %689 = vmatmul.mubr.f32.gmra.mrb[0].mxu0 %v622
    %v690 = vpop.f32.mrb[0].mxu0
    %v691 = vadd.f32 0.0, %v690
    %v692 = vpop.f32.mrb[0].mxu0
    %693 = vdwg.mxu0
    %v695 = vrot.slane %v691, 3
    %v696 = vrot.slane %v691, 4
    %v699 = vadd.f32 %v74, %v695
    %v700 = vadd.f32 %v75, %v696
    %v701 = vtanh.pop %v699
    %v702 = vtanh.pop %v700
    %v703 = vxor.u32 %v699, 2147483648
    %v704 = vxor.u32 %v700, 2147483648
    %v705 = vmul.f32 %v703, 1.442695
    %v706 = vpow.pop %v705
    %v707 = vmul.f32 %v704, 1.442695
    %v708 = vpow.pop %v707
    %v709 = vadd.f32 %v706, 1.0
    %v710 = vadd.f32 %v708, 1.0
    %v711 = vrcp.pop %v709
    %v712 = vmul.f32 1.0, %v711
    %v713 = vrcp.pop %v710
    %v714 = vmul.f32 1.0, %v713
    %v717 = vrot.slane %v701, 5
    %v718 = vrot.slane %v702, 4
    %v719 = vsel %vm93, %v718, %v717
    %v723 = vrot.slane %v712, 5
    %v724 = vrot.slane %v714, 4
    %v725 = vsel %vm93, %v724, %v723
    %v727 = vsel %vm49, %v719, %v725
    %v728 = vmul.f32 %v727, %v612
    %730 = vrot.lane.b32.xlu0 %v727, 64
    %v731 = vpop.permute.xlu0 %730
    %v733 = vmul.f32 %v727, %v731
    %735 = vrot.lane.b32.xlu0 %v733, 32
    %v736 = vpop.permute.xlu0 %735
    %v738 = vadd.f32 %v728, %v736
    %v739 = vtanh.pop %v738
    %741 = vrot.lane.b32.xlu0 %v739, 64
    %v742 = vpop.permute.xlu0 %741
    %v744 = vmul.f32 %v727, %v742
    %746 = vrot.lane.b32.xlu0 %v744, 32
    %v747 = vpop.permute.xlu0 %746
    %v748 = vsel %vm116, %v747, 0
    %750 = vmatprep.subr.mxu0 0.0
    %751 = vmatpush1.msra.mxu0 %v41
    %752 = vmatprep.subr.mxu0 0.0
    %753 = vmatpush1.msra.mxu0 %v42
    %754 = vmatprep.subr.mxu0 0.0
    %755 = vmatpush1.msra.mxu0 %v43
    %756 = vmatprep.subr.mxu0 0.0
    %757 = vmatpush1.msra.mxu0 %v44
    %758 = vmatprep.subr.mxu0 0.0
    %759 = vmatpush1.msra.mxu0 0.0
    %760 = vmatprep.subr.mxu0 0.0
    %761 = vmatpush1.msra.mxu0 0.0
    %762 = vmatprep.subr.mxu0 0.0
    %763 = vmatpush1.msra.mxu0 0.0
    %764 = vmatprep.subr.mxu0 0.0
    %765 = vmatpush1.msra.mxu0 0.0
    %766 = vmatprep.subr.mxu0 0.0
    %767 = vmatpush1.msra.mxu0 0.0
    %768 = vmatprep.subr.mxu0 0.0
    %769 = vmatpush1.msra.mxu0 0.0
    %770 = vmatprep.subr.mxu0 0.0
    %771 = vmatpush1.msra.mxu0 0.0
    %772 = vmatprep.subr.mxu0 0.0
    %773 = vmatpush1.msra.mxu0 0.0
    %774 = vmatprep.subr.mxu0 0.0
    %775 = vmatpush1.msra.mxu0 0.0
    %776 = vmatprep.subr.mxu0 0.0
    %777 = vmatpush1.msra.mxu0 0.0
    %778 = vmatprep.subr.mxu0 0.0
    %779 = vmatpush1.msra.mxu0 0.0
    %780 = vmatprep.subr.mxu0 0.0
    %781 = vmatpush1.msra.mxu0 0.0
    %782 = vmatprep.subr.mxu0 0.0
    %783 = vmatpush1.msra.mxu0 0.0
    %784 = vmatprep.subr.mxu0 0.0
    %785 = vmatpush1.msra.mxu0 0.0
    %786 = vmatprep.subr.mxu0 0.0
    %787 = vmatpush1.msra.mxu0 0.0
    %788 = vmatprep.subr.mxu0 0.0
    %789 = vmatpush1.msra.mxu0 0.0
    %790 = vmatprep.subr.mxu0 0.0
    %791 = vmatpush1.msra.mxu0 0.0
    %792 = vmatprep.subr.mxu0 0.0
    %793 = vmatpush1.msra.mxu0 0.0
    %794 = vmatprep.subr.mxu0 0.0
    %795 = vmatpush1.msra.mxu0 0.0
    %796 = vmatprep.subr.mxu0 0.0
    %797 = vmatpush1.msra.mxu0 0.0
    %798 = vmatprep.subr.mxu0 0.0
    %799 = vmatpush1.msra.mxu0 0.0
    %800 = vmatprep.subr.mxu0 0.0
    %801 = vmatpush1.msra.mxu0 0.0
    %802 = vmatprep.subr.mxu0 0.0
    %803 = vmatpush1.msra.mxu0 0.0
    %804 = vmatprep.subr.mxu0 0.0
    %805 = vmatpush1.msra.mxu0 0.0
    %806 = vmatprep.subr.mxu0 0.0
    %807 = vmatpush1.msra.mxu0 0.0
    %808 = vmatprep.subr.mxu0 0.0
    %809 = vmatpush1.msra.mxu0 0.0
    %810 = vmatprep.subr.mxu0 0.0
    %811 = vmatpush1.msra.mxu0 0.0
    %812 = vmatprep.subr.mxu0 0.0
    %813 = vmatpush1.msra.mxu0 0.0
    %814 = vmatprep.mubr.f32.mxu0 0.0
    %815 = vmatmul.mubr.f32.gmra.mrb[0].mxu0 %v748
    %v816 = vpop.f32.mrb[0].mxu0
    %v817 = vadd.f32 0.0, %v816
    %v818 = vpop.f32.mrb[0].mxu0
    %819 = vdwg.mxu0
    %v821 = vrot.slane %v817, 2
    %v822 = vrot.slane %v817, 3
    %v825 = vadd.f32 %v74, %v821
    %v826 = vadd.f32 %v75, %v822
    %v827 = vtanh.pop %v825
    %v828 = vtanh.pop %v826
    %v829 = vxor.u32 %v825, 2147483648
    %v830 = vxor.u32 %v826, 2147483648
    %v831 = vmul.f32 %v829, 1.442695
    %v832 = vpow.pop %v831
    %v833 = vmul.f32 %v830, 1.442695
    %v834 = vpow.pop %v833
    %v835 = vadd.f32 %v832, 1.0
    %v836 = vadd.f32 %v834, 1.0
    %v837 = vrcp.pop %v835
    %v838 = vmul.f32 1.0, %v837
    %v839 = vrcp.pop %v836
    %v840 = vmul.f32 1.0, %v839
    %v843 = vrot.slane %v827, 6
    %v844 = vrot.slane %v828, 5
    %v845 = vsel %vm93, %v844, %v843
    %v849 = vrot.slane %v838, 6
    %v850 = vrot.slane %v840, 5
    %v851 = vsel %vm93, %v850, %v849
    %v853 = vsel %vm49, %v845, %v851
    %v854 = vmul.f32 %v853, %v738
    %856 = vrot.lane.b32.xlu0 %v853, 64
    %v857 = vpop.permute.xlu0 %856
    %v859 = vmul.f32 %v853, %v857
    %861 = vrot.lane.b32.xlu0 %v859, 32
    %v862 = vpop.permute.xlu0 %861
    %v864 = vadd.f32 %v854, %v862
    %v865 = vtanh.pop %v864
    %867 = vrot.lane.b32.xlu0 %v865, 64
    %v868 = vpop.permute.xlu0 %867
    %v870 = vmul.f32 %v853, %v868
    %872 = vrot.lane.b32.xlu0 %v870, 32
    %v873 = vpop.permute.xlu0 %872
    %v874 = vsel %vm116, %v873, 0
    %876 = vmatprep.subr.mxu0 0.0
    %877 = vmatpush1.msra.mxu0 %v41
    %878 = vmatprep.subr.mxu0 0.0
    %879 = vmatpush1.msra.mxu0 %v42
    %880 = vmatprep.subr.mxu0 0.0
    %881 = vmatpush1.msra.mxu0 %v43
    %882 = vmatprep.subr.mxu0 0.0
    %883 = vmatpush1.msra.mxu0 %v44
    %884 = vmatprep.subr.mxu0 0.0
    %885 = vmatpush1.msra.mxu0 0.0
    %886 = vmatprep.subr.mxu0 0.0
    %887 = vmatpush1.msra.mxu0 0.0
    %888 = vmatprep.subr.mxu0 0.0
    %889 = vmatpush1.msra.mxu0 0.0
    %890 = vmatprep.subr.mxu0 0.0
    %891 = vmatpush1.msra.mxu0 0.0
    %892 = vmatprep.subr.mxu0 0.0
    %893 = vmatpush1.msra.mxu0 0.0
    %894 = vmatprep.subr.mxu0 0.0
    %895 = vmatpush1.msra.mxu0 0.0
    %896 = vmatprep.subr.mxu0 0.0
    %897 = vmatpush1.msra.mxu0 0.0
    %898 = vmatprep.subr.mxu0 0.0
    %899 = vmatpush1.msra.mxu0 0.0
    %900 = vmatprep.subr.mxu0 0.0
    %901 = vmatpush1.msra.mxu0 0.0
    %902 = vmatprep.subr.mxu0 0.0
    %903 = vmatpush1.msra.mxu0 0.0
    %904 = vmatprep.subr.mxu0 0.0
    %905 = vmatpush1.msra.mxu0 0.0
    %906 = vmatprep.subr.mxu0 0.0
    %907 = vmatpush1.msra.mxu0 0.0
    %908 = vmatprep.subr.mxu0 0.0
    %909 = vmatpush1.msra.mxu0 0.0
    %910 = vmatprep.subr.mxu0 0.0
    %911 = vmatpush1.msra.mxu0 0.0
    %912 = vmatprep.subr.mxu0 0.0
    %913 = vmatpush1.msra.mxu0 0.0
    %914 = vmatprep.subr.mxu0 0.0
    %915 = vmatpush1.msra.mxu0 0.0
    %916 = vmatprep.subr.mxu0 0.0
    %917 = vmatpush1.msra.mxu0 0.0
    %918 = vmatprep.subr.mxu0 0.0
    %919 = vmatpush1.msra.mxu0 0.0
    %920 = vmatprep.subr.mxu0 0.0
    %921 = vmatpush1.msra.mxu0 0.0
    %922 = vmatprep.subr.mxu0 0.0
    %923 = vmatpush1.msra.mxu0 0.0
    %924 = vmatprep.subr.mxu0 0.0
    %925 = vmatpush1.msra.mxu0 0.0
    %926 = vmatprep.subr.mxu0 0.0
    %927 = vmatpush1.msra.mxu0 0.0
    %928 = vmatprep.subr.mxu0 0.0
    %929 = vmatpush1.msra.mxu0 0.0
    %930 = vmatprep.subr.mxu0 0.0
    %931 = vmatpush1.msra.mxu0 0.0
    %932 = vmatprep.subr.mxu0 0.0
    %933 = vmatpush1.msra.mxu0 0.0
    %934 = vmatprep.subr.mxu0 0.0
    %935 = vmatpush1.msra.mxu0 0.0
    %936 = vmatprep.subr.mxu0 0.0
    %937 = vmatpush1.msra.mxu0 0.0
    %938 = vmatprep.subr.mxu0 0.0
    %939 = vmatpush1.msra.mxu0 0.0
    %940 = vmatprep.mubr.f32.mxu0 0.0
    %941 = vmatmul.mubr.f32.gmra.mrb[0].mxu0 %v874
    %v942 = vpop.f32.mrb[0].mxu0
    %v943 = vadd.f32 0.0, %v942
    %v944 = vpop.f32.mrb[0].mxu0
    %945 = vdwg.mxu0
    %v947 = vrot.slane %v943, 1
    %v948 = vrot.slane %v943, 2
    %v951 = vadd.f32 %v74, %v947
    %v952 = vadd.f32 %v75, %v948
    %v953 = vtanh.pop %v951
    %v954 = vtanh.pop %v952
    %v955 = vxor.u32 %v951, 2147483648
    %v956 = vxor.u32 %v952, 2147483648
    %v957 = vmul.f32 %v955, 1.442695
    %v958 = vpow.pop %v957
    %v959 = vmul.f32 %v956, 1.442695
    %v960 = vpow.pop %v959
    %v961 = vadd.f32 %v958, 1.0
    %v962 = vadd.f32 %v960, 1.0
    %v963 = vrcp.pop %v961
    %v964 = vmul.f32 1.0, %v963
    %v965 = vrcp.pop %v962
    %v966 = vmul.f32 1.0, %v965
    %v969 = vrot.slane %v953, 7
    %v970 = vrot.slane %v954, 6
    %v971 = vsel %vm93, %v970, %v969
    %v975 = vrot.slane %v964, 7
    %v976 = vrot.slane %v966, 6
    %v977 = vsel %vm93, %v976, %v975
    %v979 = vsel %vm49, %v971, %v977
    %v980 = vmul.f32 %v979, %v864
    %982 = vrot.lane.b32.xlu0 %v979, 64
    %v983 = vpop.permute.xlu0 %982
    %v985 = vmul.f32 %v979, %v983
    %987 = vrot.lane.b32.xlu0 %v985, 32
    %v988 = vpop.permute.xlu0 %987
    %v990 = vadd.f32 %v980, %v988
    %v991 = vtanh.pop %v990
    %993 = vrot.lane.b32.xlu0 %v991, 64
    %v994 = vpop.permute.xlu0 %993
    %v996 = vmul.f32 %v979, %v994
    %v997 = vld [vmem:[%s4] sm:$0x1]
    %v999 = vlaneseq
    %v1000 = vshrl.u32 %v999, 7
    %v1001 = vsub.s32 0, %v1000
    %v1002 = vrot.slane %v997, %v1001
    %1003 = vrot.lane.b32.xlu0 %v1002, 96
    %v1004 = vpop.permute.xlu0 %1003
    %v1006 = vmul.f32 %v996, %v1004
    %1008 = vrot.lane.b32.xlu0 %v1006, 32
    %v1009 = vpop.permute.xlu0 %1008
    %vm1011 = vcmask 254976
    %v1012 = vsel %vm1011, %v1009, 0.0
    %1013 = vadd.xlane.f32.xlu0 %v1012
    %v1014 = vpop.xlane.xlu0 %1013
    %v1015 = vld [vmem:[#allocation2] sm:$0x1]
    %v1017 = vlaneseq
    %v1018 = vshrl.u32 %v1017, 7
    %v1019 = vsub.s32 0, %v1018
    %v1020 = vrot.slane %v1015, %v1019
    %v1022 = vadd.f32 %v1014, %v1020
    %vm1023 = vcmask 1024
    %1024 = vst.msk [vmem:[%s6] sm:$0x3] %vm1023, %v1022
    // Predicated region
    $region30: #{model_forward.1} parent=1 // pred_check
      _
    $region31: #{model_forward.1} parent=1 // pred_check_branch
      %1026 = sbr.rel (0) target = $region33
    $region32: #{model_forward.1} parent=1 // pred_region
      _
    $region33: #{model_forward.1} parent=1 // pred_fallthru
      _
    // Predicated region
    $region34: #{model_forward.1} parent=1 // pred_check
      _
    $region35: #{model_forward.1} parent=1 // pred_check_branch
      %1028 = sbr.rel (0) target = $region37
    $region36: #{model_forward.1} parent=1 // pred_region
      _
    $region37: #{model_forward.1} parent=1 // pred_fallthru
      _
    %1029 = vsyncpa [#allocation4], 1

</llo_original>
